<compile_context>
chip_gen: v7x
topology: tpu7x:2x2x1
jax: 0.10.0
libtpu: 0.0.40
codegen_flags: <defaults>
</compile_context>

<pallas_src>
import functools

import jax
import jax.numpy as jnp
from jax import lax
from jax.experimental import pallas as pl
from jax.experimental.pallas import tpu as pltpu

# ----------------------------- model config ---------------------------------
VOCAB_SIZE = 50
EMBED_DIM = 32          # embedding_dim (E)
OUT_CHANNELS = 128      # fixed in the PyTorch module (C)
OUTPUT_DIM = 4          # output_dim (O) > 1  -> LogSoftmax branch
SEQ_LEN = 8             # S
BATCH = 2               # B
DROPOUT = 0.5           # inference: dropout is identity
# TODO(synk): nn.Dropout is a no-op in eval mode; training-mode stochastic dropout is not implemented.


def _round_up(x, m):
    return (x + m - 1) // m * m


VOCAB_PAD = _round_up(VOCAB_SIZE, 8)       # 56: keeps every packed segment 8-row aligned

# Row layout of the single packed weight array (lane dim = OUT_CHANNELS = 128):
#   [0,              VOCAB_PAD)           fused conv weight (embedding @ conv_w), zero-padded rows
#   [VOCAB_PAD,      VOCAB_PAD+8)         conv bias in row VOCAB_PAD
#   [VOCAB_PAD+8,    VOCAB_PAD+8+C)       fc weight (C,O) zero-padded to (C,128)
#   [VOCAB_PAD+8+C,  VOCAB_PAD+16+C)      fc bias (padded to 128 lanes) in its first row
_PACKED_ROWS = VOCAB_PAD + 16 + OUT_CHANNELS        # 200


# ------------------------------ Pallas kernel --------------------------------
def cnn_fused_kernel(ids_ref, w_ref, out_ref, *,
                     batch, seq_len, vocab_pad, channels, out_dim, sigmoid_out):
    # ids_ref : (B*S, 1) int32   token ids, whole (possibly stacked) batch flattened
    # w_ref   : (200, 128) f32   single packed constant-operand array (see layout above)
    # out_ref : (B, O)
    bs = batch * seq_len

    # static, 8-row-aligned views into the single packed weight DMA (no extra DMAs)
    fused_w = w_ref[0:vocab_pad, :]                                        # (Vp, C)
    conv_b = w_ref[vocab_pad:vocab_pad + 1, :]                             # (1, C)
    fc_w = w_ref[vocab_pad + 8:vocab_pad + 8 + channels, :]                # (C, C); cols >= O are 0
    fc_b = w_ref[vocab_pad + 8 + channels:vocab_pad + 9 + channels, :]     # (1, C); lanes >= O are 0

    # --- embedding gather + Conv2d(kernel=(1,E)) fused into ONE one-hot MXU matmul over V ---
    ids = ids_ref[...]                                                     # (B*S, 1) int32
    vocab_iota = lax.broadcasted_iota(jnp.int32, (bs, vocab_pad), 1)       # (B*S, Vp)
    one_hot = (ids == vocab_iota).astype(jnp.float32)                      # (B*S, Vp)
    fm = jnp.dot(one_hot, fused_w, preferred_element_type=jnp.float32)     # (B*S, C)

    # --- max_pool1d over the full sequence (S=8 -> one (8,128) tile per batch, XLU reduce) ---
    pooled = jnp.max(fm.reshape(batch, seq_len, channels), axis=1)         # (B, C)

    # bias + ReLU hoisted past the pool. Exact ONLY because ReLU is monotone and the
    # bias is constant over S; a per-position bias would break this identity.
    pooled = jnp.maximum(pooled + conv_b, 0.0)                             # (B, C)

    # dropout: identity (eval mode)

    # --- fc: lane-padded (C,128) weight keeps the matmul MXU-canonical; padded cols stay 0 ---
    logits = (jnp.dot(pooled, fc_w, preferred_element_type=jnp.float32)
              + fc_b)[:, :out_dim]                                         # (B, O)

    if sigmoid_out:
        out_ref[...] = jax.nn.sigmoid(logits)
    else:
        # numerically-stable log-softmax over the class axis (dim=1)
        m = jnp.max(logits, axis=1, keepdims=True)
        z = logits - m
        out_ref[...] = z - jnp.log(jnp.sum(jnp.exp(z), axis=1, keepdims=True))


def cnn_forward(ids, packed_w, *, seq_len, out_dim):
    """Full forward pass in a single gridless Pallas invocation.

    ids      : (N*seq_len, 1) int32 token ids. Stack as many request blocks as you like per
               call to amortize the fixed pallas_call + DMA latency (marginal cost per extra
               sample is ~zero until B*S reaches a few hundred rows).
    packed_w : (_PACKED_ROWS, OUT_CHANNELS) f32 from pack_params().
    """
    total_rows = ids.shape[0]
    batch = total_rows // seq_len
    channels = packed_w.shape[1]

    kernel = functools.partial(
        cnn_fused_kernel,
        batch=batch, seq_len=seq_len, vocab_pad=VOCAB_PAD,
        channels=channels, out_dim=out_dim, sigmoid_out=(out_dim == 1),
    )

    vmem = pl.BlockSpec(memory_space=pltpu.MemorySpace.VMEM)
    # Gridless on purpose at tiny batch; for large stacked batches on v7x, switch to a 1-D
    # "parallel" grid over batch rows so both TensorCores split the work.
    return pl.pallas_call(
        kernel,
        out_shape=jax.ShapeDtypeStruct((batch, out_dim), jnp.float32),
        in_specs=[vmem, vmem],
        out_specs=vmem,
    )(ids, packed_w)


# --------------------------- deterministic params ----------------------------
def init_params(key):
    k_emb, k_cw, k_cb, k_fw, k_fb = jax.random.split(key, 5)
    # nn.Embedding: N(0, 1)
    embedding = jax.random.normal(k_emb, (VOCAB_SIZE, EMBED_DIM), jnp.float32)
    # Conv2d weight (C, 1, 1, E) -> stored as (E, C) for the matmul formulation
    conv_w = 0.1 * jax.random.normal(k_cw, (EMBED_DIM, OUT_CHANNELS), jnp.float32)
    conv_b = 0.1 * jax.random.normal(k_cb, (1, OUT_CHANNELS), jnp.float32)
    # Linear weight (O, C) -> stored transposed as (C, O)
    fc_w = 0.1 * jax.random.normal(k_fw, (OUT_CHANNELS, OUTPUT_DIM), jnp.float32)
    fc_b = 0.1 * jax.random.normal(k_fb, (1, OUTPUT_DIM), jnp.float32)
    return {"embedding": embedding, "conv_w": conv_w, "conv_b": conv_b,
            "fc_w": fc_w, "fc_b": fc_b}


def pack_params(params):
    """One-time param prep: fold the embedding table into the conv weight and pack every
    constant operand into a single contiguous (200,128) f32 array -> exactly one weight DMA."""
    V, C, O = VOCAB_SIZE, OUT_CHANNELS, OUTPUT_DIM
    # full-f32 precompute so the fold stays numerically equivalent to gather-then-conv
    fused_w = jnp.dot(params["embedding"], params["conv_w"],
                      precision=lax.Precision.HIGHEST)                       # (V, C)
    blk_conv_w = jnp.zeros((VOCAB_PAD, C), jnp.float32).at[:V].set(fused_w)  # (56, 128)
    blk_conv_b = jnp.zeros((8, C), jnp.float32).at[0].set(params["conv_b"][0])
    blk_fc_w = jnp.zeros((C, C), jnp.float32).at[:, :O].set(params["fc_w"])  # (128, 128)
    blk_fc_b = jnp.zeros((8, C), jnp.float32).at[0, :O].set(params["fc_b"][0])
    packed = jnp.concatenate([blk_conv_w, blk_conv_b, blk_fc_w, blk_fc_b], axis=0)
    assert packed.shape == (_PACKED_ROWS, C)
    return packed


def reference_forward(x_ids, params):
    """Pure-JAX reference mirroring the PyTorch forward (eval mode), on UNfused params."""
    emb = params["embedding"][x_ids]                                  # (B, S, E)
    fm = jnp.einsum("bse,ec->bsc", emb, params["conv_w"]) + params["conv_b"][None]
    fm = jnp.maximum(fm, 0.0)                                         # (B, S, C)
    pooled = jnp.max(fm, axis=1)                                      # (B, C)
    logits = pooled @ params["fc_w"] + params["fc_b"]                 # (B, O)
    if OUTPUT_DIM == 1:
        return jax.nn.sigmoid(logits)
    return jax.nn.log_softmax(logits, axis=1)


# ----------------------------------- main -------------------------------------
if __name__ == "__main__":
    key = jax.random.PRNGKey(0)
    k_params, k_x = jax.random.split(key)
    params = init_params(k_params)
    packed_w = pack_params(params)

    # Token ids arrive exactly as the kernel wants them: int32, (B*S, 1) — no glue ops.
    ids = jax.random.randint(k_x, (BATCH * SEQ_LEN, 1), 0, VOCAB_SIZE, dtype=jnp.int32)

    out = cnn_forward(ids, packed_w, seq_len=SEQ_LEN, out_dim=OUTPUT_DIM)
    out = jax.block_until_ready(out)

    ref = jax.block_until_ready(reference_forward(ids.reshape(BATCH, SEQ_LEN), params))
    assert out.shape == (BATCH, OUTPUT_DIM)
    assert jnp.allclose(out, ref, atol=1e-5, rtol=1e-5)

    print("KERNEL_OK")
</pallas_src>

<mosaic_0001>
module attributes {stable_mosaic.version = 11 : i64} {
  func.func @cnn_fused_kernel(%arg0: memref<16x1xi32, #tpu.memory_space<vmem>>, %arg1: memref<200x128xf32, #tpu.memory_space<vmem>>, %arg2: memref<2x4xf32, #tpu.memory_space<vmem>>) attributes {dimension_semantics = [], scalar_prefetch = 0 : i64, scratch_operands = 0 : i64, tpu.core_type = #tpu.core_type<tc>} {
    %c0 = arith.constant 0 : index
    %c0_0 = arith.constant 0 : index
    %0 = vector.load %arg1[%c0, %c0_0] : memref<200x128xf32, #tpu.memory_space<vmem>>, vector<56x128xf32>
    %c56 = arith.constant 56 : index
    %c0_1 = arith.constant 0 : index
    %1 = vector.load %arg1[%c56, %c0_1] : memref<200x128xf32, #tpu.memory_space<vmem>>, vector<1x128xf32>
    %c64 = arith.constant 64 : index
    %c0_2 = arith.constant 0 : index
    %2 = vector.load %arg1[%c64, %c0_2] : memref<200x128xf32, #tpu.memory_space<vmem>>, vector<128x128xf32>
    %c192 = arith.constant 192 : index
    %c0_3 = arith.constant 0 : index
    %3 = vector.load %arg1[%c192, %c0_3] : memref<200x128xf32, #tpu.memory_space<vmem>>, vector<1x128xf32>
    %c0_4 = arith.constant 0 : index
    %c0_5 = arith.constant 0 : index
    %4 = vector.load %arg0[%c0_4, %c0_5] : memref<16x1xi32, #tpu.memory_space<vmem>>, vector<16x1xi32>
    %5 = tpu.iota {dimensions = array<i32: 1>} : vector<16x56xi32>
    %6 = vector.broadcast %4 : vector<16x1xi32> to vector<16x56xi32>
    %7 = arith.cmpi eq, %6, %5 : vector<16x56xi32>
    %8 = arith.extui %7 : vector<16x56xi1> to vector<16x56xi32>
    %9 = arith.sitofp %8 : vector<16x56xi32> to vector<16x56xf32>
    %cst = arith.constant dense<0.000000e+00> : vector<16x128xf32>
    %10 = tpu.matmul %9, %0, %cst {dimension_numbers = #tpu.dot_dimension_numbers<[1], [0], [0], [1], [0, 0, 1, 1], [], []>} : vector<16x56xf32>, vector<56x128xf32>, vector<16x128xf32> -> vector<16x128xf32>
    %11 = vector.shape_cast %10 : vector<16x128xf32> to vector<2x8x128xf32>
    %cst_6 = arith.constant dense<0xFF800000> : vector<2x128xf32>
    %12 = vector.multi_reduction <maximumf>, %11, %cst_6 [1] : vector<2x8x128xf32> to vector<2x128xf32>
    %13 = vector.broadcast %1 : vector<1x128xf32> to vector<2x128xf32>
    %14 = arith.addf %12, %13 : vector<2x128xf32>
    %cst_7 = arith.constant 0.000000e+00 : f32
    %15 = vector.broadcast %cst_7 : f32 to vector<2x128xf32>
    %16 = arith.maximumf %14, %15 : vector<2x128xf32>
    %cst_8 = arith.constant dense<0.000000e+00> : vector<2x128xf32>
    %17 = tpu.matmul %16, %2, %cst_8 {dimension_numbers = #tpu.dot_dimension_numbers<[1], [0], [0], [1], [0, 0, 1, 1], [], []>} : vector<2x128xf32>, vector<128x128xf32>, vector<2x128xf32> -> vector<2x128xf32>
    %18 = vector.broadcast %3 : vector<1x128xf32> to vector<2x128xf32>
    %19 = arith.addf %17, %18 : vector<2x128xf32>
    %20 = vector.extract_strided_slice %19 {offsets = [0, 0], sizes = [2, 4], strides = [1, 1]} : vector<2x128xf32> to vector<2x4xf32>
    %cst_9 = arith.constant dense<0xFF800000> : vector<2xf32>
    %21 = vector.multi_reduction <maximumf>, %20, %cst_9 [1] : vector<2x4xf32> to vector<2xf32>
    %22 = vector.shape_cast %21 : vector<2xf32> to vector<2x1xf32>
    %23 = vector.broadcast %22 : vector<2x1xf32> to vector<2x4xf32>
    %24 = arith.subf %20, %23 : vector<2x4xf32>
    %25 = math.exp %24 : vector<2x4xf32>
    %cst_10 = arith.constant dense<0.000000e+00> : vector<2xf32>
    %26 = vector.multi_reduction <add>, %25, %cst_10 [1] : vector<2x4xf32> to vector<2xf32>
    %27 = vector.shape_cast %26 : vector<2xf32> to vector<2x1xf32>
    %28 = math.log %27 : vector<2x1xf32>
    %29 = vector.broadcast %28 : vector<2x1xf32> to vector<2x4xf32>
    %30 = arith.subf %24, %29 : vector<2x4xf32>
    %c0_11 = arith.constant 0 : index
    %c0_12 = arith.constant 0 : index
    %31 = vector.load %arg2[%c0_11, %c0_12] : memref<2x4xf32, #tpu.memory_space<vmem>>, vector<2x4xf32>
    tpu.vector_store %arg2[%c0_11, %c0_12], %30 {strides = array<i32>} : memref<2x4xf32, #tpu.memory_space<vmem>>, vector<2x4xf32>,
    return
  }
}

</mosaic_0001>

<llo_original>
// kernel: tpu_custom_call.1
$region0: #{tpu_custom_call.1}
  #allocation0 [shape = 'u32[]', space=smem, size = 0x4, offset = 0x4, fixed_abs, tag = 'smem constant byte address 0x4 - core index']
  #allocation1 [shape = 'u32[144,128]{1,0:T(1,128)}', space=vmem, size = 0x12000, scoped, tag = 'internal scratch']
  %s0 = inlined_call_operand.vmem [shape: s32[16,1], index: 0, kind: input, shape index: {}]
  %s1 = inlined_call_operand.hbm [shape: f32[200,128], index: 1, kind: input, shape index: {}]
  %s2 = inlined_call_operand.hbm [shape: f32[2,4], index: 2, kind: output, shape index: {}]
  %s3 = sld [smem:[#allocation0]]
  $region22: #{tpu_custom_call.1} parent=0
    _
  %s5 = ssub.s32 1, %s3
  %s6 = scalar_select 0, %s5, %s3
  $region1: #{tpu_custom_call.1} parent=0
    #allocation2 [shape = 'u8[102400]{0}', space=vmem, size = 0x19000, scoped, tag = 'input window, operand 1, single buffered']
    #allocation3 [shape = 's32[1]{0}', space=sflag, size = 0x4, scoped, tag = 'scoped memory for tpu_custom_call.1']
    #allocation4 [shape = 's32[1]{0}', space=sflag, size = 0x4, scoped, tag = 'scoped memory for tpu_custom_call.1']
    #allocation5 [shape = 'u8[1024]{0}', space=vmem, size = 0x400, scoped, tag = 'output window, operand 0, single buffered']
    %7 = vsyncpa [#allocation3], 0
    %8 = vsyncpa [#allocation4], 0
    // Predicated region
    $region2: #{tpu_custom_call.1} parent=1 // pred_check
      _
    $region3: #{tpu_custom_call.1} parent=1 // pred_check_branch
      %10 = sbr.rel (0) target = $region5
    $region4: #{tpu_custom_call.1} parent=1 // pred_region
      _
    $region5: #{tpu_custom_call.1} parent=1 // pred_fallthru
      _
    // Predicated region
    $region6: #{tpu_custom_call.1} parent=1 // pred_check
      _
    $region7: #{tpu_custom_call.1} parent=1 // pred_check_branch
      %12 = sbr.rel (0) target = $region9
    $region8: #{tpu_custom_call.1} parent=1 // pred_region
      %s14 = ssub.s32 3200, 3200
      %15 = vsyncadd [#allocation3], %s14
      %s16 = sshll.u32 [#allocation2], 4
      %s17 = int_to_ptr.vmem [resolvable:$true] %s16
      %22 = dma.hbm_to_vmem [thread:$0]  %s1, 3200, %s17, [#allocation3], 128, 128, 8
    $region9: #{tpu_custom_call.1} parent=1 // pred_fallthru
      _
    // Predicated region
    $region10: #{tpu_custom_call.1} parent=1 // pred_check
      _
    $region11: #{tpu_custom_call.1} parent=1 // pred_check_branch
      %24 = sbr.rel (0) target = $region13
    $region12: #{tpu_custom_call.1} parent=1 // pred_region
      %25 = dma.done [#allocation3], 3200
    $region13: #{tpu_custom_call.1} parent=1 // pred_fallthru
      _
    %v26 = vld [vmem:[#allocation2] sm:$0xff]
    %v27 = vld [vmem:[#allocation2 + $0x8] sm:$0xff]
    %v28 = vld [vmem:[#allocation2 + $0x10] sm:$0xff]
    %v29 = vld [vmem:[#allocation2 + $0x18] sm:$0xff]
    %v30 = vld [vmem:[#allocation2 + $0x20] sm:$0xff]
    %v31 = vld [vmem:[#allocation2 + $0x28] sm:$0xff]
    %v32 = vld [vmem:[#allocation2 + $0x30] sm:$0xff]
    %v33 = vld [vmem:[#allocation2 + $0x38] sm:$0x1]
    %v34 = vld [vmem:[#allocation2 + $0x40] sm:$0xff]
    %v35 = vld [vmem:[#allocation2 + $0x48] sm:$0xff]
    %v36 = vld [vmem:[#allocation2 + $0x50] sm:$0xff]
    %v37 = vld [vmem:[#allocation2 + $0x58] sm:$0xff]
    %v38 = vld [vmem:[#allocation2 + $0x60] sm:$0xff]
    %v39 = vld [vmem:[#allocation2 + $0x68] sm:$0xff]
    %v40 = vld [vmem:[#allocation2 + $0x70] sm:$0xff]
    %v41 = vld [vmem:[#allocation2 + $0x78] sm:$0xff]
    %v42 = vld [vmem:[#allocation2 + $0x80] sm:$0xff]
    %v43 = vld [vmem:[#allocation2 + $0x88] sm:$0xff]
    %v44 = vld [vmem:[#allocation2 + $0x90] sm:$0xff]
    %v45 = vld [vmem:[#allocation2 + $0x98] sm:$0xff]
    %v46 = vld [vmem:[#allocation2 + $0xa0] sm:$0xff]
    %v47 = vld [vmem:[#allocation2 + $0xa8] sm:$0xff]
    %v48 = vld [vmem:[#allocation2 + $0xb0] sm:$0xff]
    %v49 = vld [vmem:[#allocation2 + $0xb8] sm:$0xff]
    %v50 = vld [vmem:[#allocation2 + $0xc0] sm:$0x1]
    %v51 = vld [vmem:[%s0] sm:$0xff]
    %v52 = vld [vmem:[%s0 + $0x8] sm:$0xff]
    %v53 = vlaneseq
    %v54 = vand.u32 %v53, 127
    %55 = vset.pattern.permute.xlu0 0
    %56 = vperm.xlu0 %55, %v51
    %v57 = vpop.permute.xlu0 %56
    %58 = vset.pattern.permute.xlu0 0
    %59 = vperm.xlu0 %58, %v52
    %v60 = vpop.permute.xlu0 %59
    %vm61 = vcmp.eq.s32.totalorder %v57, %v54
    %vm62 = vcmp.eq.s32.totalorder %v60, %v54
    %v63 = vsel %vm61, 1, 0
    %v64 = vsel %vm62, 1, 0
    %v65 = vcvt.s32.f32 %v63
    %v66 = vcvt.s32.f32 %v64
    %vm67 = vcmask 457728
    %v69 = vsel %vm67, %v65, 0
    %v72 = vsel %vm67, %v66, 0
    %74 = vmatprep.subr.mxu0 0.0
    %75 = vmatpush1.msra.mxu0 %v26
    %76 = vmatprep.subr.mxu0 0.0
    %77 = vmatpush1.msra.mxu0 %v27
    %78 = vmatprep.subr.mxu0 0.0
    %79 = vmatpush1.msra.mxu0 %v28
    %80 = vmatprep.subr.mxu0 0.0
    %81 = vmatpush1.msra.mxu0 %v29
    %82 = vmatprep.subr.mxu0 0.0
    %83 = vmatpush1.msra.mxu0 %v30
    %84 = vmatprep.subr.mxu0 0.0
    %85 = vmatpush1.msra.mxu0 %v31
    %86 = vmatprep.subr.mxu0 0.0
    %87 = vmatpush1.msra.mxu0 %v32
    %88 = vmatprep.subr.mxu0 0.0
    %89 = vmatpush1.msra.mxu0 0.0
    %90 = vmatprep.subr.mxu0 0.0
    %91 = vmatpush1.msra.mxu0 0.0
    %92 = vmatprep.subr.mxu0 0.0
    %93 = vmatpush1.msra.mxu0 0.0
    %94 = vmatprep.subr.mxu0 0.0
    %95 = vmatpush1.msra.mxu0 0.0
    %96 = vmatprep.subr.mxu0 0.0
    %97 = vmatpush1.msra.mxu0 0.0
    %98 = vmatprep.subr.mxu0 0.0
    %99 = vmatpush1.msra.mxu0 0.0
    %100 = vmatprep.subr.mxu0 0.0
    %101 = vmatpush1.msra.mxu0 0.0
    %102 = vmatprep.subr.mxu0 0.0
    %103 = vmatpush1.msra.mxu0 0.0
    %104 = vmatprep.subr.mxu0 0.0
    %105 = vmatpush1.msra.mxu0 0.0
    %106 = vmatprep.subr.mxu0 0.0
    %107 = vmatpush1.msra.mxu0 0.0
    %108 = vmatprep.subr.mxu0 0.0
    %109 = vmatpush1.msra.mxu0 0.0
    %110 = vmatprep.subr.mxu0 0.0
    %111 = vmatpush1.msra.mxu0 0.0
    %112 = vmatprep.subr.mxu0 0.0
    %113 = vmatpush1.msra.mxu0 0.0
    %114 = vmatprep.subr.mxu0 0.0
    %115 = vmatpush1.msra.mxu0 0.0
    %116 = vmatprep.subr.mxu0 0.0
    %117 = vmatpush1.msra.mxu0 0.0
    %118 = vmatprep.subr.mxu0 0.0
    %119 = vmatpush1.msra.mxu0 0.0
    %120 = vmatprep.subr.mxu0 0.0
    %121 = vmatpush1.msra.mxu0 0.0
    %122 = vmatprep.subr.mxu0 0.0
    %123 = vmatpush1.msra.mxu0 0.0
    %124 = vmatprep.subr.mxu0 0.0
    %125 = vmatpush1.msra.mxu0 0.0
    %126 = vmatprep.subr.mxu0 0.0
    %127 = vmatpush1.msra.mxu0 0.0
    %128 = vmatprep.subr.mxu0 0.0
    %129 = vmatpush1.msra.mxu0 0.0
    %130 = vmatprep.subr.mxu0 0.0
    %131 = vmatpush1.msra.mxu0 0.0
    %132 = vmatprep.subr.mxu0 0.0
    %133 = vmatpush1.msra.mxu0 0.0
    %134 = vmatprep.subr.mxu0 0.0
    %135 = vmatpush1.msra.mxu0 0.0
    %136 = vmatprep.subr.mxu0 0.0
    %137 = vmatpush1.msra.mxu0 0.0
    %138 = vmatprep.mubr.f32.mxu0 0.0
    %139 = vmatmul.mubr.f32.gmra.mrb[0].mxu0 %v69
    %v140 = vpop.f32.mrb[0].mxu0
    %v141 = vadd.f32 0.0, %v140
    %v142 = vpop.f32.mrb[0].mxu0
    %143 = vmatprep.mubr.f32.mxu0 0.0
    %144 = vmatmul.mubr.f32.gmra.mrb[0].mxu0 %v72
    %v145 = vpop.f32.mrb[0].mxu0
    %v146 = vadd.f32 0.0, %v145
    %v147 = vpop.f32.mrb[0].mxu0
    %148 = vdwg.mxu0
    %v149 = vrot.slane %v141, 4
    %v150 = vmax.f32 %v141, %v149
    %v151 = vrot.slane %v150, 2
    %v152 = vmax.f32 %v150, %v151
    %v153 = vrot.slane %v152, 1
    %v154 = vmax.f32 %v152, %v153
    %v155 = vrot.slane %v146, 4
    %v156 = vmax.f32 %v146, %v155
    %v157 = vrot.slane %v156, 2
    %v158 = vmax.f32 %v156, %v157
    %v159 = vrot.slane %v158, 1
    %v160 = vmax.f32 %v158, %v159
    %v161 = vlaneseq
    %v162 = vshrl.u32 %v161, 7
    %v163 = vsub.s32 0, %v162
    %v164 = vrot.slane %v33, %v163
    %v165 = vadd.f32 %v154, %v164
    %v166 = vadd.f32 %v160, %v164
    %v167 = vmax.f32 %v165, 0.0
    %v168 = vmax.f32 %v166, 0.0
    %v169 = vlaneseq
    %v170 = vshrl.u32 %v169, 7
    %v171 = vsub.s32 0, %v170
    %v172 = vrot.slane %v50, %v171
    %v175 = vrot.slane %v168, 7
    %vm176 = vcmask 1041409
    %v177 = vsel %vm176, %v175, %v167
    %179 = vmatprep.subr.mxu0 0.0
    %180 = vmatpush1.msra.mxu0 %v34
    %181 = vmatprep.subr.mxu0 0.0
    %182 = vmatpush1.msra.mxu0 %v35
    %183 = vmatprep.subr.mxu0 0.0
    %184 = vmatpush1.msra.mxu0 %v36
    %185 = vmatprep.subr.mxu0 0.0
    %186 = vmatpush1.msra.mxu0 %v37
    %187 = vmatprep.subr.mxu0 0.0
    %188 = vmatpush1.msra.mxu0 %v38
    %189 = vmatprep.subr.mxu0 0.0
    %190 = vmatpush1.msra.mxu0 %v39
    %191 = vmatprep.subr.mxu0 0.0
    %192 = vmatpush1.msra.mxu0 %v40
    %193 = vmatprep.subr.mxu0 0.0
    %194 = vmatpush1.msra.mxu0 %v41
    %195 = vmatprep.subr.mxu0 0.0
    %196 = vmatpush1.msra.mxu0 %v42
    %197 = vmatprep.subr.mxu0 0.0
    %198 = vmatpush1.msra.mxu0 %v43
    %199 = vmatprep.subr.mxu0 0.0
    %200 = vmatpush1.msra.mxu0 %v44
    %201 = vmatprep.subr.mxu0 0.0
    %202 = vmatpush1.msra.mxu0 %v45
    %203 = vmatprep.subr.mxu0 0.0
    %204 = vmatpush1.msra.mxu0 %v46
    %205 = vmatprep.subr.mxu0 0.0
    %206 = vmatpush1.msra.mxu0 %v47
    %207 = vmatprep.subr.mxu0 0.0
    %208 = vmatpush1.msra.mxu0 %v48
    %209 = vmatprep.subr.mxu0 0.0
    %210 = vmatpush1.msra.mxu0 %v49
    %211 = vmatprep.subr.mxu0 0.0
    %212 = vmatpush1.msra.mxu0 0.0
    %213 = vmatprep.subr.mxu0 0.0
    %214 = vmatpush1.msra.mxu0 0.0
    %215 = vmatprep.subr.mxu0 0.0
    %216 = vmatpush1.msra.mxu0 0.0
    %217 = vmatprep.subr.mxu0 0.0
    %218 = vmatpush1.msra.mxu0 0.0
    %219 = vmatprep.subr.mxu0 0.0
    %220 = vmatpush1.msra.mxu0 0.0
    %221 = vmatprep.subr.mxu0 0.0
    %222 = vmatpush1.msra.mxu0 0.0
    %223 = vmatprep.subr.mxu0 0.0
    %224 = vmatpush1.msra.mxu0 0.0
    %225 = vmatprep.subr.mxu0 0.0
    %226 = vmatpush1.msra.mxu0 0.0
    %227 = vmatprep.subr.mxu0 0.0
    %228 = vmatpush1.msra.mxu0 0.0
    %229 = vmatprep.subr.mxu0 0.0
    %230 = vmatpush1.msra.mxu0 0.0
    %231 = vmatprep.subr.mxu0 0.0
    %232 = vmatpush1.msra.mxu0 0.0
    %233 = vmatprep.subr.mxu0 0.0
    %234 = vmatpush1.msra.mxu0 0.0
    %235 = vmatprep.subr.mxu0 0.0
    %236 = vmatpush1.msra.mxu0 0.0
    %237 = vmatprep.subr.mxu0 0.0
    %238 = vmatpush1.msra.mxu0 0.0
    %239 = vmatprep.subr.mxu0 0.0
    %240 = vmatpush1.msra.mxu0 0.0
    %241 = vmatprep.subr.mxu0 0.0
    %242 = vmatpush1.msra.mxu0 0.0
    %243 = vmatprep.mubr.f32.mxu0 0.0
    %244 = vmatmul.mubr.f32.gmra.mrb[0].mxu0 %v177
    %v245 = vpop.f32.mrb[0].mxu0
    %v246 = vadd.f32 %v172, %v245
    %v247 = vpop.f32.mrb[0].mxu0
    %248 = vdwg.mxu0
    %vm249 = vcmask 25600
    %v250 = vsel %vm249, %v246, -inf
    %251 = vmax.xlane.f32.xlu0 %v250
    %v252 = vpop.xlane.xlu0 %251
    %v253 = vsub.f32 %v246, %v252
    %v254 = vmul.f32 %v253, 1.442695
    %v255 = vpow.pop %v254
    %v256 = vsel %vm249, %v255, 0.0
    %257 = vadd.xlane.f32.xlu0 %v256
    %v258 = vpop.xlane.xlu0 %257
    %v259 = vlog2.pop %v258
    %v260 = vmul.f32 %v259, 0.6931472
    %v261 = vsub.f32 %v253, %v260
    %262 = vst.msk [vmem:[#allocation5] sm:$0x3] %vm249, %v261
    // Predicated region
    $region14: #{tpu_custom_call.1} parent=1 // pred_check
      _
    $region15: #{tpu_custom_call.1} parent=1 // pred_check_branch
      %264 = sbr.rel (0) target = $region17
    $region16: #{tpu_custom_call.1} parent=1 // pred_region
      %s266 = ssub.s32 32, 32
      %267 = vsyncadd [#allocation4], %s266
      %s269 = sshll.u32 [#allocation5], 4
      %s270 = int_to_ptr.vmem [resolvable:$true] %s269
      %272 = dma.vmem_to_hbm [thread:$0]  %s270, 32, %s2, [#allocation4]
    $region17: #{tpu_custom_call.1} parent=1 // pred_fallthru
      _
    // Predicated region
    $region18: #{tpu_custom_call.1} parent=1 // pred_check
      _
    $region19: #{tpu_custom_call.1} parent=1 // pred_check_branch
      %274 = sbr.rel (0) target = $region21
    $region20: #{tpu_custom_call.1} parent=1 // pred_region
      %275 = dma.done [#allocation4], 32
    $region21: #{tpu_custom_call.1} parent=1 // pred_fallthru
      _
    %276 = vsyncpa [#allocation3], 1
    %277 = vsyncpa [#allocation4], 1

</llo_original>
